<compile_context>
chip_gen: v6e
topology: v6e:2x2x1
jax: 0.10.0
libtpu: 0.0.40
codegen_flags: <defaults>
</compile_context>

<pallas_src>
import functools

import jax
import jax.numpy as jnp
from jax.experimental import pallas as pl
from jax.experimental.pallas import tpu as pltpu


_VMEM_LIMIT = 32 << 20     # safe scoped-VMEM ceiling on v5e / v6e / v7x
_FUSED_BUDGET = 20 << 20   # max live bytes allowed for the fused per-batch path


def _round_up(n, m):
    return ((n + m - 1) // m) * m


def _pick_div(n, quantum, cap):
    """Largest multiple of `quantum` that divides `n` and is <= cap.
    Falls back to `n` (full dimension, always BlockSpec-legal)."""
    best = None
    d = quantum
    limit = min(n, cap)
    while d <= limit:
        if n % d == 0:
            best = d
        d += quantum
    return best if best is not None else n


def _lane_tile(hw, row_bytes, per_buf_budget, cap):
    """Lane (last-dim) tile: multiple of 128, as large as the per-buffer VMEM
    budget allows (targets >= 512 where the shape permits), never exceeding
    the largest 128-multiple <= HW (so only standard cdiv edge blocks occur)."""
    if hw <= 128:
        return hw                                   # full extent, always legal
    t = (per_buf_budget // max(1, row_bytes)) // 128 * 128
    t = min(t, cap, (hw // 128) * 128)
    return max(128, int(t))


# ---------------------------------------------------------------------------
# Fused path: pool + FC + sigmoid + rescale in a single HBM pass over x.
# ---------------------------------------------------------------------------
def _fused_kernel(x_ref, wd_ref, bd_ref, wu_ref, bu_ref, o_ref, *, inv_hw):
    # x_ref / o_ref: (1, C, HW); wd: (INT, C); bd: (INT, 1); wu: (C, INT); bu: (C, 1)
    x = x_ref[0]                                                      # (C, HW)
    pooled = jnp.sum(x.astype(jnp.float32), axis=-1, keepdims=True) * inv_hw   # (C, 1)
    hidden = jnp.dot(wd_ref[...], pooled,
                     preferred_element_type=jnp.float32) + bd_ref[...]
    hidden = jnp.maximum(hidden, 0.0)                                 # (INT, 1)
    logits = jnp.dot(wu_ref[...], hidden,
                     preferred_element_type=jnp.float32) + bu_ref[...]
    scale = jax.nn.sigmoid(logits)                                    # (C, 1) f32
    # Multiply in the input dtype (matches the PyTorch module's dtype flow).
    o_ref[...] = (x * scale.astype(x.dtype))[None]


# ---------------------------------------------------------------------------
# Two-pass fallback, pass 1: pooled mean over HW (+ per-batch FC chain).
# ---------------------------------------------------------------------------
def _pool_fc_kernel(x_ref, wd_ref, bd_ref, wu_ref, bu_ref, scale_ref, acc_ref,
                    *, hw, inv_hw):
    # x_ref: (1, C, thw); scale_ref: (1, C, 1) f32 out; acc_ref: (C, 1) f32 scratch.
    h = pl.program_id(1)
    thw = x_ref.shape[-1]

    @pl.when(h == 0)
    def _():
        acc_ref[...] = jnp.zeros_like(acc_ref)

    x = x_ref[0].astype(jnp.float32)                                  # (C, thw)
    # Mask the ragged HW tail: OOB lanes of the edge block are unspecified and
    # must not contaminate the pooled sum.
    lane = jax.lax.broadcasted_iota(jnp.int32, x.shape, 1)
    x = jnp.where(lane < (hw - h * thw), x, 0.0)
    acc_ref[...] += jnp.sum(x, axis=-1, keepdims=True)                # (C, 1)

    @pl.when(h == pl.num_programs(1) - 1)
    def _():
        pooled = acc_ref[...] * inv_hw                                # (C, 1)
        hidden = jnp.dot(wd_ref[...], pooled,
                         preferred_element_type=jnp.float32) + bd_ref[...]
        hidden = jnp.maximum(hidden, 0.0)                             # (INT, 1)
        logits = jnp.dot(wu_ref[...], hidden,
                         preferred_element_type=jnp.float32) + bu_ref[...]
        scale_ref[...] = jax.nn.sigmoid(logits)[None]                 # (1, C, 1)


# ---------------------------------------------------------------------------
# Two-pass fallback, pass 2: lane-dense elementwise rescale (HBM-bound).
# ---------------------------------------------------------------------------
def _rescale_kernel(x_ref, scale_ref, o_ref):
    # x_ref/o_ref: (1, tc, thw); scale_ref: (1, tc, 1) f32 (resident across HW).
    s = scale_ref[...].astype(o_ref.dtype)
    o_ref[...] = x_ref[...] * s


def se_block(x, w_down, b_down, w_up, b_up, *, force_two_pass=False):
    """x: [B, C, H, W].  w_down: [INT, C, 1, 1], b_down: [INT],
    w_up: [C, INT, 1, 1], b_up: [C].  Returns [B, C, H, W]."""
    B, C, H, W = x.shape
    INT = w_down.shape[0]
    HW = H * W
    inv_hw = float(1.0 / HW)
    itemsize = jnp.dtype(x.dtype).itemsize

    x2 = x.reshape(B, C, HW)                 # free metadata reshape (no pad)
    wd = w_down.reshape(INT, C)
    wu = w_up.reshape(C, INT)
    bd = b_down.reshape(INT, 1).astype(jnp.float32)
    bu = b_up.reshape(C, 1).astype(jnp.float32)

    # Fused-path live VMEM: double-buffered in + out slabs + one f32 temp for
    # the pooling upcast.  20 MiB budget leaves headroom on v7x (64 MiB VMEM)
    # and trivially fits v5e/v6e (128 MiB).
    fused_live = C * HW * (4 * itemsize + 4)
    if not force_two_pass and fused_live <= _FUSED_BUDGET:
        out = pl.pallas_call(
            functools.partial(_fused_kernel, inv_hw=inv_hw),
            out_shape=jax.ShapeDtypeStruct((B, C, HW), x.dtype),
            grid_spec=pltpu.PrefetchScalarGridSpec(
                num_scalar_prefetch=0,
                grid=(B,),
                in_specs=[
                    pl.BlockSpec((1, C, HW), lambda b: (b, 0, 0)),
                    pl.BlockSpec((INT, C), lambda b: (0, 0)),
                    pl.BlockSpec((INT, 1), lambda b: (0, 0)),
                    pl.BlockSpec((C, INT), lambda b: (0, 0)),
                    pl.BlockSpec((C, 1), lambda b: (0, 0)),
                ],
                out_specs=pl.BlockSpec((1, C, HW), lambda b: (b, 0, 0)),
            ),
            compiler_params=pltpu.CompilerParams(
                dimension_semantics=("parallel",),
                vmem_limit_bytes=_VMEM_LIMIT),
        )(x2, wd, bd, wu, bu)
        return out.reshape(B, C, H, W)

    # ---- Two-pass fallback (per-batch slab too large for VMEM) -------------
    # Pass 1: scale = sigmoid(up(relu(down(avg_pool(x))))) : (B, C, 1) f32.
    thw1 = _lane_tile(HW, C * itemsize, per_buf_budget=4 << 20, cap=2048)
    n_hw1 = pl.cdiv(HW, thw1)

    scale = pl.pallas_call(
        functools.partial(_pool_fc_kernel, hw=HW, inv_hw=inv_hw),
        out_shape=jax.ShapeDtypeStruct((B, C, 1), jnp.float32),
        grid_spec=pltpu.PrefetchScalarGridSpec(
            num_scalar_prefetch=0,
            grid=(B, n_hw1),
            in_specs=[
                pl.BlockSpec((1, C, thw1), lambda b, h: (b, 0, h)),
                pl.BlockSpec((INT, C), lambda b, h: (0, 0)),
                pl.BlockSpec((INT, 1), lambda b, h: (0, 0)),
                pl.BlockSpec((C, INT), lambda b, h: (0, 0)),
                pl.BlockSpec((C, 1), lambda b, h: (0, 0)),
            ],
            out_specs=pl.BlockSpec((1, C, 1), lambda b, h: (b, 0, 0)),
            scratch_shapes=[pltpu.VMEM((C, 1), jnp.float32)],
        ),
        compiler_params=pltpu.CompilerParams(
            dimension_semantics=("parallel", "arbitrary"),
            vmem_limit_bytes=_VMEM_LIMIT),
    )(x2, wd, bd, wu, bu)

    # Pass 2: out = x * scale, tiled lane-dense, all axes parallel.
    tc = _pick_div(C, 8, 512)
    thw2 = _lane_tile(HW, tc * itemsize, per_buf_budget=2 << 20, cap=2048)
    n_c = C // tc
    n_hw2 = pl.cdiv(HW, thw2)

    out = pl.pallas_call(
        _rescale_kernel,
        out_shape=jax.ShapeDtypeStruct((B, C, HW), x.dtype),
        grid_spec=pltpu.PrefetchScalarGridSpec(
            num_scalar_prefetch=0,
            grid=(B, n_c, n_hw2),
            in_specs=[
                pl.BlockSpec((1, tc, thw2), lambda b, c, h: (b, c, h)),
                pl.BlockSpec((1, tc, 1), lambda b, c, h: (b, c, 0)),
            ],
            out_specs=pl.BlockSpec((1, tc, thw2), lambda b, c, h: (b, c, h)),
        ),
        compiler_params=pltpu.CompilerParams(
            dimension_semantics=("parallel", "parallel", "parallel"),
            vmem_limit_bytes=_VMEM_LIMIT),
    )(x2, scale)

    return out.reshape(B, C, H, W)


def se_block_ref(x, w_down, b_down, w_up, b_up):
    """Pure-JAX reference matching the PyTorch forward."""
    B, C, H, W = x.shape
    INT = w_down.shape[0]
    pooled = jnp.mean(x, axis=(2, 3))                                   # (B, C)
    hidden = jnp.maximum(pooled @ w_down.reshape(INT, C).T + b_down, 0.0)
    scale = jax.nn.sigmoid(hidden @ w_up.reshape(C, INT).T + b_up)      # (B, C)
    return x * scale[:, :, None, None]


def _make_inputs(key, B, C, H, W, INT, dtype=jnp.float32):
    kx, k1, k2, k3, k4 = jax.random.split(key, 5)
    x = jax.random.normal(kx, (B, C, H, W), dtype=dtype)
    w_down = jax.random.normal(k1, (INT, C, 1, 1), dtype=dtype) * 0.1
    b_down = jax.random.normal(k2, (INT,), dtype=dtype) * 0.1
    w_up = jax.random.normal(k3, (C, INT, 1, 1), dtype=dtype) * 0.1
    b_up = jax.random.normal(k4, (C,), dtype=dtype) * 0.1
    return x, w_down, b_down, w_up, b_up


if __name__ == "__main__":
    key = jax.random.PRNGKey(0)
    k_main, k_ragged = jax.random.split(key, 2)

    # Primary small test (fused single-pass path).
    B, C, H, W, INT = 2, 4, 16, 16, 8
    x, wd, bd, wu, bu = _make_inputs(k_main, B, C, H, W, INT)
    out = jax.block_until_ready(se_block(x, wd, bd, wu, bu))
    ref = se_block_ref(x, wd, bd, wu, bu)
    assert out.shape == (B, C, H, W)
    assert jnp.allclose(out, ref, atol=1e-5, rtol=1e-5), "fused path mismatch"

    # Same shape through the two-pass fallback (exact-division HW tiling).
    out2 = jax.block_until_ready(se_block(x, wd, bd, wu, bu, force_two_pass=True))
    assert jnp.allclose(out2, ref, atol=1e-5, rtol=1e-5), "two-pass path mismatch"

    # Ragged spatial size (13x13 -> HW=169) through the two-pass fallback to
    # exercise cdiv grids, edge blocks and the in-kernel tail mask.
    B2, C2, H2, W2, INT2 = 2, 8, 13, 13, 4
    x3, wd3, bd3, wu3, bu3 = _make_inputs(k_ragged, B2, C2, H2, W2, INT2)
    out3 = jax.block_until_ready(se_block(x3, wd3, bd3, wu3, bu3,
                                          force_two_pass=True))
    ref3 = se_block_ref(x3, wd3, bd3, wu3, bu3)
    assert jnp.allclose(out3, ref3, atol=1e-5, rtol=1e-5), "ragged path mismatch"

    print("KERNEL_OK")
</pallas_src>

<mosaic_0001>
module attributes {stable_mosaic.version = 11 : i64} {
  func.func @_fused_kernel(%arg0: i32, %arg1: memref<1x4x256xf32, #tpu.memory_space<vmem>>, %arg2: memref<8x4xf32, #tpu.memory_space<vmem>>, %arg3: memref<8x1xf32, #tpu.memory_space<vmem>>, %arg4: memref<4x8xf32, #tpu.memory_space<vmem>>, %arg5: memref<4x1xf32, #tpu.memory_space<vmem>>, %arg6: memref<1x4x256xf32, #tpu.memory_space<vmem>>) attributes {dimension_semantics = [#tpu.dimension_semantics<parallel>], iteration_bounds = array<i64: 2>, scalar_prefetch = 0 : i64, scratch_operands = 0 : i64, tpu.core_type = #tpu.core_type<tc>, window_params = [{transform_indices = @transform_0, window_bounds = array<i64: 1, 4, 256>}, {pipeline_mode = #tpu.pipeline_mode<synchronous>, transform_indices = @transform_1, window_bounds = array<i64: 8, 4>}, {pipeline_mode = #tpu.pipeline_mode<synchronous>, transform_indices = @transform_2, window_bounds = array<i64: 8, 1>}, {pipeline_mode = #tpu.pipeline_mode<synchronous>, transform_indices = @transform_3, window_bounds = array<i64: 4, 8>}, {pipeline_mode = #tpu.pipeline_mode<synchronous>, transform_indices = @transform_4, window_bounds = array<i64: 4, 1>}, {transform_indices = @transform_5, window_bounds = array<i64: 1, 4, 256>}]} {
    %c0 = arith.constant 0 : index
    %c0_0 = arith.constant 0 : index
    %c0_1 = arith.constant 0 : index
    %0 = vector.load %arg1[%c0, %c0_0, %c0_1] : memref<1x4x256xf32, #tpu.memory_space<vmem>>, vector<1x4x256xf32>
    %1 = vector.shape_cast %0 : vector<1x4x256xf32> to vector<4x256xf32>
    %cst = arith.constant dense<0.000000e+00> : vector<4xf32>
    %2 = vector.multi_reduction <add>, %1, %cst [1] : vector<4x256xf32> to vector<4xf32>
    %3 = vector.shape_cast %2 : vector<4xf32> to vector<4x1xf32>
    %cst_2 = arith.constant 3.906250e-03 : f32
    %4 = vector.broadcast %cst_2 : f32 to vector<4x1xf32>
    %5 = arith.mulf %3, %4 : vector<4x1xf32>
    %c0_3 = arith.constant 0 : index
    %c0_4 = arith.constant 0 : index
    %6 = vector.load %arg2[%c0_3, %c0_4] : memref<8x4xf32, #tpu.memory_space<vmem>>, vector<8x4xf32>
    %cst_5 = arith.constant dense<0.000000e+00> : vector<8x1xf32>
    %7 = tpu.matmul %6, %5, %cst_5 {dimension_numbers = #tpu.dot_dimension_numbers<[1], [0], [0], [1], [0, 0, 1, 1], [], []>} : vector<8x4xf32>, vector<4x1xf32>, vector<8x1xf32> -> vector<8x1xf32>
    %c0_6 = arith.constant 0 : index
    %c0_7 = arith.constant 0 : index
    %8 = vector.load %arg3[%c0_6, %c0_7] : memref<8x1xf32, #tpu.memory_space<vmem>>, vector<8x1xf32>
    %9 = arith.addf %7, %8 : vector<8x1xf32>
    %cst_8 = arith.constant 0.000000e+00 : f32
    %10 = vector.broadcast %cst_8 : f32 to vector<8x1xf32>
    %11 = arith.maximumf %9, %10 : vector<8x1xf32>
    %c0_9 = arith.constant 0 : index
    %c0_10 = arith.constant 0 : index
    %12 = vector.load %arg4[%c0_9, %c0_10] : memref<4x8xf32, #tpu.memory_space<vmem>>, vector<4x8xf32>
    %cst_11 = arith.constant dense<0.000000e+00> : vector<4x1xf32>
    %13 = tpu.matmul %12, %11, %cst_11 {dimension_numbers = #tpu.dot_dimension_numbers<[1], [0], [0], [1], [0, 0, 1, 1], [], []>} : vector<4x8xf32>, vector<8x1xf32>, vector<4x1xf32> -> vector<4x1xf32>
    %c0_12 = arith.constant 0 : index
    %c0_13 = arith.constant 0 : index
    %14 = vector.load %arg5[%c0_12, %c0_13] : memref<4x1xf32, #tpu.memory_space<vmem>>, vector<4x1xf32>
    %15 = arith.addf %13, %14 : vector<4x1xf32>
    %16 = arith.negf %15 : vector<4x1xf32>
    %17 = math.exp %16 : vector<4x1xf32>
    %cst_14 = arith.constant 1.000000e+00 : f32
    %18 = vector.broadcast %cst_14 : f32 to vector<4x1xf32>
    %19 = arith.addf %18, %17 : vector<4x1xf32>
    %20 = arith.divf %18, %19 : vector<4x1xf32>
    %21 = vector.broadcast %20 : vector<4x1xf32> to vector<4x256xf32>
    %22 = arith.mulf %1, %21 : vector<4x256xf32>
    %23 = vector.shape_cast %22 : vector<4x256xf32> to vector<1x4x256xf32>
    %c0_15 = arith.constant 0 : index
    %c0_16 = arith.constant 0 : index
    %c0_17 = arith.constant 0 : index
    %24 = vector.load %arg6[%c0_15, %c0_16, %c0_17] : memref<1x4x256xf32, #tpu.memory_space<vmem>>, vector<1x4x256xf32>
    tpu.vector_store %arg6[%c0_15, %c0_16, %c0_17], %23 {strides = array<i32>} : memref<1x4x256xf32, #tpu.memory_space<vmem>>, vector<1x4x256xf32>,
    return
  }
  func.func @transform_0(%arg0: i32) -> (i32, i32, i32) {
    %c0_i32 = arith.constant 0 : i32
    %c0_i32_0 = arith.constant 0 : i32
    %c0_i32_1 = arith.constant 0 : i32
    return %arg0, %c0_i32, %c0_i32_0 : i32, i32, i32
  }
  func.func @transform_1(%arg0: i32) -> (i32, i32) {
    %c0_i32 = arith.constant 0 : i32
    %c0_i32_0 = arith.constant 0 : i32
    %c0_i32_1 = arith.constant 0 : i32
    return %c0_i32, %c0_i32_0 : i32, i32
  }
  func.func @transform_2(%arg0: i32) -> (i32, i32) {
    %c0_i32 = arith.constant 0 : i32
    %c0_i32_0 = arith.constant 0 : i32
    %c0_i32_1 = arith.constant 0 : i32
    return %c0_i32, %c0_i32_0 : i32, i32
  }
  func.func @transform_3(%arg0: i32) -> (i32, i32) {
    %c0_i32 = arith.constant 0 : i32
    %c0_i32_0 = arith.constant 0 : i32
    %c0_i32_1 = arith.constant 0 : i32
    return %c0_i32, %c0_i32_0 : i32, i32
  }
  func.func @transform_4(%arg0: i32) -> (i32, i32) {
    %c0_i32 = arith.constant 0 : i32
    %c0_i32_0 = arith.constant 0 : i32
    %c0_i32_1 = arith.constant 0 : i32
    return %c0_i32, %c0_i32_0 : i32, i32
  }
  func.func @transform_5(%arg0: i32) -> (i32, i32, i32) {
    %c0_i32 = arith.constant 0 : i32
    %c0_i32_0 = arith.constant 0 : i32
    %c0_i32_1 = arith.constant 0 : i32
    return %arg0, %c0_i32, %c0_i32_0 : i32, i32, i32
  }
}

</mosaic_0001>

<llo_original>
// kernel: tpu_custom_call.1
$region0: #{tpu_custom_call.1}
  #allocation0 [shape = 'u32[]', space=smem, size = 0x4, offset = 0x4, fixed_abs, tag = 'smem constant byte address 0x4 - core index']
  #allocation1 [shape = 'u32[144,128]{1,0:T(1,128)}', space=vmem, size = 0x12000, scoped, tag = 'internal scratch']
  %s0 = inlined_call_operand.vmem [shape: f32[2,4,256], index: 0, kind: input, shape index: {}]
  %s1 = inlined_call_operand.vmem [shape: f32[8,4], index: 1, kind: input, shape index: {}]
  %s2 = inlined_call_operand.vmem [shape: f32[8,1], index: 2, kind: input, shape index: {}]
  %s3 = inlined_call_operand.vmem [shape: f32[4,8], index: 3, kind: input, shape index: {}]
  %s4 = inlined_call_operand.vmem [shape: f32[4,1], index: 4, kind: input, shape index: {}]
  %s5 = inlined_call_operand.hbm [shape: f32[2,4,256], index: 5, kind: output, shape index: {}]
  %s6 = sld [smem:[#allocation0]]
  $region53: #{tpu_custom_call.1} parent=0
    _
  %s8 = ssub.s32 1, %s6
  %s9 = scalar_select 0, %s8, %s6
  $region1: #{tpu_custom_call.1} parent=0
    #allocation2 [shape = 'u8[8192]{0}', space=vmem, size = 0x2000, scoped, tag = 'output window, operand 0']
    #allocation3 [shape = 's32[2]{0}', space=sflag, size = 0x8, scoped, tag = 'scoped memory for tpu_custom_call.1']
    %10 = vsyncpa [#allocation3], 0
    %s11 = scalar_lea.sflag [#allocation3], 1
    %12 = vsyncpa %s11, 0
    loop: start=0, step=1, limit=4
    $region2: #{tpu_custom_call.1} parent=1 // loop_pre_header
      _
    $region3: #{tpu_custom_call.1} parent=1 // loop_header
      %s14 = sphi 0, %s18
      %p15 = scmp.ge.s32.totalorder %s14, 4
      %s24 = sphi 0, %s26
      %s27 = sphi 0, %s24
      %s28 = sphi 0, %s27
      %s44 = sphi 0, %s28
      %s48 = sphi 0, %s48
      %s50 = sphi 0, %s48
      %s51 = sphi 0, %s50
      %s65 = sphi 0, %s51
      %s69 = sphi 0, %s69
      %s71 = sphi 0, %s69
      %s72 = sphi 0, %s71
      %s86 = sphi 0, %s72
      %s90 = sphi 0, %s90
      %s92 = sphi 0, %s90
      %s93 = sphi 0, %s92
      %s107 = sphi 0, %s93
      %s111 = sphi 0, %s111
      %s113 = sphi 0, %s111
      %s114 = sphi 0, %s113
      %s128 = sphi 0, %s114
      %s134 = sphi 0, %s136
      %s137 = sphi 0, %s134
      %s138 = sphi 0, %s137
      %s154 = sphi 0, %s138
    $region4: #{tpu_custom_call.1} parent=1 // loop_header_branch
      %17 = sbr.rel (%p15) target = $region8
    $region5: #{tpu_custom_call.1} parent=1 // loop_body
      %s19 = ssub.s32 %s14, 1
      %s20 = ssub.s32 %s14, 2
      %s21 = sadd.s32 %s14, 1
      %s22 = ssub.s32 %s14, %s21
      %p23 = scmp.eq.s32.totalorder %s22, 0
      %s25 = sadd.s32 %s24, 1
      %s26 = scalar_select %p23, %s24, %s25
      %p29 = pneg %p23
      %p30 = scmp.eq.s32.totalorder %s14, 1
      %p31 = por %p29, %p30
      %p32 = scmp.ne.s32.totalorder %s24, %s27
      %p33 = scmp.eq.s32.totalorder %s14, 0
      %p34 = por %p32, %p33
      %p35 = scmp.ne.s32.totalorder %s24, %s27
      %p36 = scmp.eq.s32.totalorder %s19, 1
      %p37 = por %p35, %p36
      %p38 = scmp.ne.s32.totalorder %s27, %s28
      %p39 = scmp.eq.s32.totalorder %s19, 0
      %p40 = por %p38, %p39
      %p41 = scmp.ne.s32.totalorder %s27, %s28
      %p42 = scmp.eq.s32.totalorder %s20, 1
      %p43 = por %p41, %p42
      %p45 = scmp.ne.s32.totalorder %s28, %s44
      %p46 = scmp.eq.s32.totalorder %s20, 0
      %p47 = por %p45, %p46
      %s49 = sadd.s32 %s48, 1
      %p52 = scmp.eq.s32.totalorder %s14, 1
      %p53 = scmp.ne.s32.totalorder %s48, %s50
      %p54 = scmp.eq.s32.totalorder %s14, 0
      %p55 = por %p53, %p54
      %p56 = scmp.ne.s32.totalorder %s48, %s50
      %p57 = scmp.eq.s32.totalorder %s19, 1
      %p58 = por %p56, %p57
      %p59 = scmp.ne.s32.totalorder %s50, %s51
      %p60 = scmp.eq.s32.totalorder %s19, 0
      %p61 = por %p59, %p60
      %p62 = scmp.ne.s32.totalorder %s50, %s51
      %p63 = scmp.eq.s32.totalorder %s20, 1
      %p64 = por %p62, %p63
      %p66 = scmp.ne.s32.totalorder %s51, %s65
      %p67 = scmp.eq.s32.totalorder %s20, 0
      %p68 = por %p66, %p67
      %s70 = sadd.s32 %s69, 1
      %p73 = scmp.eq.s32.totalorder %s14, 1
      %p74 = scmp.ne.s32.totalorder %s69, %s71
      %p75 = scmp.eq.s32.totalorder %s14, 0
      %p76 = por %p74, %p75
      %p77 = scmp.ne.s32.totalorder %s69, %s71
      %p78 = scmp.eq.s32.totalorder %s19, 1
      %p79 = por %p77, %p78
      %p80 = scmp.ne.s32.totalorder %s71, %s72
      %p81 = scmp.eq.s32.totalorder %s19, 0
      %p82 = por %p80, %p81
      %p83 = scmp.ne.s32.totalorder %s71, %s72
      %p84 = scmp.eq.s32.totalorder %s20, 1
      %p85 = por %p83, %p84
      %p87 = scmp.ne.s32.totalorder %s72, %s86
      %p88 = scmp.eq.s32.totalorder %s20, 0
      %p89 = por %p87, %p88
      %s91 = sadd.s32 %s90, 1
      %p94 = scmp.eq.s32.totalorder %s14, 1
      %p95 = scmp.ne.s32.totalorder %s90, %s92
      %p96 = scmp.eq.s32.totalorder %s14, 0
      %p97 = por %p95, %p96
      %p98 = scmp.ne.s32.totalorder %s90, %s92
      %p99 = scmp.eq.s32.totalorder %s19, 1
      %p100 = por %p98, %p99
      %p101 = scmp.ne.s32.totalorder %s92, %s93
      %p102 = scmp.eq.s32.totalorder %s19, 0
      %p103 = por %p101, %p102
      %p104 = scmp.ne.s32.totalorder %s92, %s93
      %p105 = scmp.eq.s32.totalorder %s20, 1
      %p106 = por %p104, %p105
      %p108 = scmp.ne.s32.totalorder %s93, %s107
      %p109 = scmp.eq.s32.totalorder %s20, 0
      %p110 = por %p108, %p109
      %s112 = sadd.s32 %s111, 1
      %p115 = scmp.eq.s32.totalorder %s14, 1
      %p116 = scmp.ne.s32.totalorder %s111, %s113
      %p117 = scmp.eq.s32.totalorder %s14, 0
      %p118 = por %p116, %p117
      %p119 = scmp.ne.s32.totalorder %s111, %s113
      %p120 = scmp.eq.s32.totalorder %s19, 1
      %p121 = por %p119, %p120
      %p122 = scmp.ne.s32.totalorder %s113, %s114
      %p123 = scmp.eq.s32.totalorder %s19, 0
      %p124 = por %p122, %p123
      %p125 = scmp.ne.s32.totalorder %s113, %s114
      %p126 = scmp.eq.s32.totalorder %s20, 1
      %p127 = por %p125, %p126
      %p129 = scmp.ne.s32.totalorder %s114, %s128
      %p130 = scmp.eq.s32.totalorder %s20, 0
      %p131 = por %p129, %p130
      %s132 = ssub.s32 %s14, %s21
      %p133 = scmp.eq.s32.totalorder %s132, 0
      %s135 = sadd.s32 %s134, 1
      %s136 = scalar_select %p133, %s134, %s135
      %p139 = pneg %p133
      %p140 = scmp.eq.s32.totalorder %s14, 1
      %p141 = por %p139, %p140
      %p142 = scmp.ne.s32.totalorder %s134, %s137
      %p143 = scmp.eq.s32.totalorder %s14, 0
      %p144 = por %p142, %p143
      %p145 = scmp.ne.s32.totalorder %s134, %s137
      %p146 = scmp.eq.s32.totalorder %s19, 1
      %p147 = por %p145, %p146
      %p148 = scmp.ne.s32.totalorder %s137, %s138
      %p149 = scmp.eq.s32.totalorder %s19, 0
      %p150 = por %p148, %p149
      %p151 = scmp.ne.s32.totalorder %s137, %s138
      %p152 = scmp.eq.s32.totalorder %s20, 1
      %p153 = por %p151, %p152
      %p155 = scmp.ne.s32.totalorder %s138, %s154
      %p156 = scmp.eq.s32.totalorder %s20, 0
      %p157 = por %p155, %p156
      %p158 = scmp.le.s32.totalorder 1, %s14
      %p159 = scmp.lt.s32.totalorder %s14, 3
      %p160 = pnand %p158, %p159
      %p161 = pneg %p160
      // Predicated region
      $region9: #{tpu_custom_call.1} parent=5 // pred_check
        _
      $region10: #{tpu_custom_call.1} parent=5 // pred_check_branch
        %163 = sbr.rel (%p160) target = $region12
      $region11: #{tpu_custom_call.1} parent=5 // pred_region
        %s164 = ssub.s32 %s14, 1
        // Predicated region
        $region13: #{tpu_custom_call.1} parent=11 // pred_check
          %p165 = pneg %p61
        $region14: #{tpu_custom_call.1} parent=11 // pred_check_branch
          %167 = sbr.rel (%p165) target = $region16
        $region15: #{tpu_custom_call.1} parent=11 // pred_region
          _
        $region16: #{tpu_custom_call.1} parent=11 // pred_fallthru
          _
        // Predicated region
        $region17: #{tpu_custom_call.1} parent=11 // pred_check
          %p168 = pneg %p82
        $region18: #{tpu_custom_call.1} parent=11 // pred_check_branch
          %170 = sbr.rel (%p168) target = $region20
        $region19: #{tpu_custom_call.1} parent=11 // pred_region
          _
        $region20: #{tpu_custom_call.1} parent=11 // pred_fallthru
          _
        // Predicated region
        $region21: #{tpu_custom_call.1} parent=11 // pred_check
          %p171 = pneg %p103
        $region22: #{tpu_custom_call.1} parent=11 // pred_check_branch
          %173 = sbr.rel (%p171) target = $region24
        $region23: #{tpu_custom_call.1} parent=11 // pred_region
          _
        $region24: #{tpu_custom_call.1} parent=11 // pred_fallthru
          _
        // Predicated region
        $region25: #{tpu_custom_call.1} parent=11 // pred_check
          %p174 = pneg %p124
        $region26: #{tpu_custom_call.1} parent=11 // pred_check_branch
          %176 = sbr.rel (%p174) target = $region28
        $region27: #{tpu_custom_call.1} parent=11 // pred_region
          _
        $region28: #{tpu_custom_call.1} parent=11 // pred_fallthru
          _
      $region12: #{tpu_custom_call.1} parent=5 // pred_fallthru
        _
      %p177 = scmp.lt.s32.totalorder %s14, 2
      // Predicated region
      $region29: #{tpu_custom_call.1} parent=5 // pred_check
        %p178 = pneg %p177
      $region30: #{tpu_custom_call.1} parent=5 // pred_check_branch
        %180 = sbr.rel (%p178) target = $region32
      $region31: #{tpu_custom_call.1} parent=5 // pred_region
        // Predicated region
        $region33: #{tpu_custom_call.1} parent=31 // pred_check
          %p181 = pneg %p34
        $region34: #{tpu_custom_call.1} parent=31 // pred_check_branch
          %183 = sbr.rel (%p181) target = $region36
        $region35: #{tpu_custom_call.1} parent=31 // pred_region
          %p184 = scmp.lt.s32.totalorder %s14, 1
          %s185 = scalar_select %p184, %s14, 1
          %s186 = smul.addr %s185, 2
          %s187 = smul.addr %s186, 4
          %s188 = scalar_lea.vmem %s0, %s187
        $region36: #{tpu_custom_call.1} parent=31 // pred_fallthru
          _
      $region32: #{tpu_custom_call.1} parent=5 // pred_fallthru
        _
      %p189 = scmp.le.s32.totalorder 1, %s14
      %p190 = scmp.lt.s32.totalorder %s14, 3
      %p191 = pnand %p189, %p190
      %p192 = pneg %p191
      // Predicated region
      $region37: #{tpu_custom_call.1} parent=5 // pred_check
        _
      $region38: #{tpu_custom_call.1} parent=5 // pred_check_branch
        %194 = sbr.rel (%p191) target = $region40
      $region39: #{tpu_custom_call.1} parent=5 // pred_region
        %s195 = ssub.s32 %s14, 1
        %p196 = scmp.lt.s32.totalorder %s19, 1
        %s197 = scalar_select %p196, %s19, 1
        %s198 = smul.addr %s197, 2
        %s199 = smul.addr %s198, 4
        %s200 = scalar_lea.vmem %s0, %s199
        %p201 = pneg %p40
        %p202 = pneg %p37
        %p203 = pneg %p61
        %p204 = pneg %p58
        %p205 = pneg %p82
        %p206 = pneg %p79
        %p207 = pneg %p103
        %p208 = pneg %p100
        %p209 = pneg %p124
        %p210 = pneg %p121
        %p211 = pneg %p150
        %p212 = pneg %p147
        %s213 = sand.u32 %s137, 1
        %s214 = scalar_lea.sflag [#allocation3], %s213
        %s215 = sand.u32 %s137, 1
        %s216 = smul.addr %s215, 8
        %s217 = scalar_lea.vmem [#allocation2], %s216
        %p218 = scmp.lt.s32.totalorder %s19, 1
        %s219 = scalar_select %p218, %s19, 1
        %s220 = smul.addr %s219, 2
        %s221 = smul.addr %s220, 4
        %s222 = scalar_lea.vmem %s0, %s221
        %v223 = vld [vmem:[%s222] sm:$0xff]
        %v225 = vcombine.high %v223, %v223
        %vm227 = vcmask 1043456
        %v228 = vsel %vm227, %v223, 0.0
        %v229 = vsel %vm227, %v225, 0.0
        %v230 = vadd.f32 %v228, %v229
        %231 = vadd.xlane.f32.xlu0 %v230
        %v232 = vpop.xlane.xlu0 %231
        %v233 = vmul.f32 %v232, 0.00390625
        %v234 = vld [vmem:[%s1] sm:$0xff]
        %v235 = vld [vmem:[%s2] sm:$0xff]
        %vm236 = vcmask 31744
        %v238 = vsel %vm236, %v234, 0
        %v241 = vsel %vm227, %v233, 0
        %243 = vmatprep.subr.mxu0 0.0
        %244 = vmatpush1.msra.mxu0 0.0
        %245 = vmatprep.subr.mxu0 0.0
        %246 = vmatpush1.msra.mxu0 0.0
        %247 = vmatprep.subr.mxu0 0.0
        %248 = vmatpush1.msra.mxu0 0.0
        %249 = vmatprep.subr.mxu0 0.0
        %250 = vmatpush1.msra.mxu0 0.0
        %251 = vmatprep.subr.mxu0 0.0
        %252 = vmatpush1.msra.mxu0 0.0
        %253 = vmatprep.subr.mxu0 0.0
        %254 = vmatpush1.msra.mxu0 0.0
        %255 = vmatprep.subr.mxu0 0.0
        %256 = vmatpush1.msra.mxu0 0.0
        %257 = vmatprep.subr.mxu0 0.0
        %258 = vmatpush1.msra.mxu0 0.0
        %259 = vmatprep.subr.mxu0 0.0
        %260 = vmatpush1.msra.mxu0 0.0
        %261 = vmatprep.subr.mxu0 0.0
        %262 = vmatpush1.msra.mxu0 0.0
        %263 = vmatprep.subr.mxu0 0.0
        %264 = vmatpush1.msra.mxu0 0.0
        %265 = vmatprep.subr.mxu0 0.0
        %266 = vmatpush1.msra.mxu0 0.0
        %267 = vmatprep.subr.mxu0 0.0
        %268 = vmatpush1.msra.mxu0 0.0
        %269 = vmatprep.subr.mxu0 0.0
        %270 = vmatpush1.msra.mxu0 0.0
        %271 = vmatprep.subr.mxu0 0.0
        %272 = vmatpush1.msra.mxu0 0.0
        %273 = vmatprep.subr.mxu0 0.0
        %274 = vmatpush1.msra.mxu0 %v241
        %275 = vmatprep.subr.mxu0 0.0
        %276 = vmatpush2.msra.mxu0 0.0
        %277 = vmatprep.subr.mxu0 0.0
        %278 = vmatpush2.msra.mxu0 0.0
        %279 = vmatprep.subr.mxu0 0.0
        %280 = vmatpush2.msra.mxu0 0.0
        %281 = vmatprep.subr.mxu0 0.0
        %282 = vmatpush2.msra.mxu0 0.0
        %283 = vmatprep.subr.mxu0 0.0
        %284 = vmatpush2.msra.mxu0 0.0
        %285 = vmatprep.subr.mxu0 0.0
        %286 = vmatpush2.msra.mxu0 0.0
        %287 = vmatprep.subr.mxu0 0.0
        %288 = vmatpush2.msra.mxu0 0.0
        %289 = vmatprep.subr.mxu0 0.0
        %290 = vmatpush2.msra.mxu0 0.0
        %291 = vmatprep.subr.mxu0 0.0
        %292 = vmatpush2.msra.mxu0 0.0
        %293 = vmatprep.subr.mxu0 0.0
        %294 = vmatpush2.msra.mxu0 0.0
        %295 = vmatprep.subr.mxu0 0.0
        %296 = vmatpush2.msra.mxu0 0.0
        %297 = vmatprep.subr.mxu0 0.0
        %298 = vmatpush2.msra.mxu0 0.0
        %299 = vmatprep.subr.mxu0 0.0
        %300 = vmatpush2.msra.mxu0 0.0
        %301 = vmatprep.subr.mxu0 0.0
        %302 = vmatpush2.msra.mxu0 0.0
        %303 = vmatprep.subr.mxu0 0.0
        %304 = vmatpush2.msra.mxu0 0.0
        %305 = vmatprep.subr.mxu0 0.0
        %306 = vmatpush2.msra.mxu0 0.0
        %307 = vmatprep.mubr.f32.mxu0 0.0
        %308 = vmatmul.mubr.f32.gmra.mxu0 %v238
        %v309 = vpop.f32.mrf.mxu0
        %v310 = vadd.f32 %v235, %v309
        %v311 = vpop.f32.mrf.mxu0
        %312 = vdwg.mxu0
        %v313 = vmax.f32 %v310, 0.0
        %v314 = vld [vmem:[%s3] sm:$0xf]
        %v315 = vld [vmem:[%s4] sm:$0xf]
        %vm316 = vcmask 64512
        %v318 = vsel %vm316, %v314, 0
        %320 = vmatprep.subr.mxu0 0.0
        %321 = vmatpush1.msra.mxu0 0.0
        %322 = vmatprep.subr.mxu0 0.0
        %323 = vmatpush1.msra.mxu0 0.0
        %324 = vmatprep.subr.mxu0 0.0
        %325 = vmatpush1.msra.mxu0 0.0
        %326 = vmatprep.subr.mxu0 0.0
        %327 = vmatpush1.msra.mxu0 0.0
        %328 = vmatprep.subr.mxu0 0.0
        %329 = vmatpush1.msra.mxu0 0.0
        %330 = vmatprep.subr.mxu0 0.0
        %331 = vmatpush1.msra.mxu0 0.0
        %332 = vmatprep.subr.mxu0 0.0
        %333 = vmatpush1.msra.mxu0 0.0
        %334 = vmatprep.subr.mxu0 0.0
        %335 = vmatpush1.msra.mxu0 0.0
        %336 = vmatprep.subr.mxu0 0.0
        %337 = vmatpush1.msra.mxu0 0.0
        %338 = vmatprep.subr.mxu0 0.0
        %339 = vmatpush1.msra.mxu0 0.0
        %340 = vmatprep.subr.mxu0 0.0
        %341 = vmatpush1.msra.mxu0 0.0
        %342 = vmatprep.subr.mxu0 0.0
        %343 = vmatpush1.msra.mxu0 0.0
        %344 = vmatprep.subr.mxu0 0.0
        %345 = vmatpush1.msra.mxu0 0.0
        %346 = vmatprep.subr.mxu0 0.0
        %347 = vmatpush1.msra.mxu0 0.0
        %348 = vmatprep.subr.mxu0 0.0
        %349 = vmatpush1.msra.mxu0 0.0
        %350 = vmatprep.subr.mxu0 0.0
        %351 = vmatpush1.msra.mxu0 %v313
        %352 = vmatprep.subr.mxu0 0.0
        %353 = vmatpush2.msra.mxu0 0.0
        %354 = vmatprep.subr.mxu0 0.0
        %355 = vmatpush2.msra.mxu0 0.0
        %356 = vmatprep.subr.mxu0 0.0
        %357 = vmatpush2.msra.mxu0 0.0
        %358 = vmatprep.subr.mxu0 0.0
        %359 = vmatpush2.msra.mxu0 0.0
        %360 = vmatprep.subr.mxu0 0.0
        %361 = vmatpush2.msra.mxu0 0.0
        %362 = vmatprep.subr.mxu0 0.0
        %363 = vmatpush2.msra.mxu0 0.0
        %364 = vmatprep.subr.mxu0 0.0
        %365 = vmatpush2.msra.mxu0 0.0
        %366 = vmatprep.subr.mxu0 0.0
        %367 = vmatpush2.msra.mxu0 0.0
        %368 = vmatprep.subr.mxu0 0.0
        %369 = vmatpush2.msra.mxu0 0.0
        %370 = vmatprep.subr.mxu0 0.0
        %371 = vmatpush2.msra.mxu0 0.0
        %372 = vmatprep.subr.mxu0 0.0
        %373 = vmatpush2.msra.mxu0 0.0
        %374 = vmatprep.subr.mxu0 0.0
        %375 = vmatpush2.msra.mxu0 0.0
        %376 = vmatprep.subr.mxu0 0.0
        %377 = vmatpush2.msra.mxu0 0.0
        %378 = vmatprep.subr.mxu0 0.0
        %379 = vmatpush2.msra.mxu0 0.0
        %380 = vmatprep.subr.mxu0 0.0
        %381 = vmatpush2.msra.mxu0 0.0
        %382 = vmatprep.subr.mxu0 0.0
        %383 = vmatpush2.msra.mxu0 0.0
        %384 = vmatprep.mubr.f32.mxu0 0.0
        %385 = vmatmul.mubr.f32.gmra.mxu0 %v318
        %v386 = vpop.f32.mrf.mxu0
        %v387 = vadd.f32 %v315, %v386
        %v388 = vpop.f32.mrf.mxu0
        %389 = vdwg.mxu0
        %v390 = vxor.u32 %v387, 2147483648
        %v391 = vmul.f32 %v390, 1.442695
        %v392 = vpow.pop %v391
        %v393 = vadd.f32 %v392, 1.0
        %v394 = vrcp.pop %v393
        %v395 = vmul.f32 1.0, %v394
        %397 = vset.pattern.permute.xlu0 0
        %398 = vperm.xlu0 %397, %v395
        %v399 = vpop.permute.xlu0 %398
        %v401 = vunpack.c.l.s4 839922192
        %v402 = vunpack.c.0.s8 %v401
        %v403 = vlaneseq
        %v404 = vshrl.u32 %v403, 7
        %v405 = vsub.s32 %v402, %v404
        %v406 = vrot.slane %v399, %v405
        %v408 = vmul.f32 %v223, %v406
        %409 = vst [vmem:[%s217] sm:$0xff] %v408
        %s410 = sand.u32 %s137, 1
        %s411 = scalar_lea.sflag [#allocation3], %s410
        %s412 = sand.u32 %s137, 1
        %s413 = smul.addr %s412, 8
        %s414 = scalar_lea.vmem [#allocation2], %s413
        // Predicated region
        $region41: #{tpu_custom_call.1} parent=39 // pred_check
          %p415 = pneg %p147
        $region42: #{tpu_custom_call.1} parent=39 // pred_check_branch
          %417 = sbr.rel (%p415) target = $region44
        $region43: #{tpu_custom_call.1} parent=39 // pred_region
          %s419 = ssub.s32 128, 128
          %420 = vsyncadd %s411, %s419
          %s421 = smul.addr %s19, 2
          %s422 = smul.addr %s421, 64
          %s423 = scalar_lea.hbm %s5, %s422
          %s425 = sshll.u32 %s414, 4
          %s426 = int_to_ptr.vmem [resolvable:$true] %s425
          %428 = dma.vmem_to_hbm [thread:$0]  %s426, 128, %s423, %s411
        $region44: #{tpu_custom_call.1} parent=39 // pred_fallthru
          _
      $region40: #{tpu_custom_call.1} parent=5 // pred_fallthru
        _
      %p429 = scmp.le.s32.totalorder 2, %s14
      // Predicated region
      $region45: #{tpu_custom_call.1} parent=5 // pred_check
        %p430 = pneg %p429
      $region46: #{tpu_custom_call.1} parent=5 // pred_check_branch
        %432 = sbr.rel (%p430) target = $region48
      $region47: #{tpu_custom_call.1} parent=5 // pred_region
        %s433 = ssub.s32 %s14, 2
        // Predicated region
        $region49: #{tpu_custom_call.1} parent=47 // pred_check
          %p434 = pneg %p153
        $region50: #{tpu_custom_call.1} parent=47 // pred_check_branch
          %436 = sbr.rel (%p434) target = $region52
        $region51: #{tpu_custom_call.1} parent=47 // pred_region
          %s437 = sand.u32 %s138, 1
          %s438 = scalar_lea.sflag [#allocation3], %s437
          %s439 = sand.u32 %s138, 1
          %s440 = smul.addr %s439, 8
          %s441 = scalar_lea.vmem [#allocation2], %s440
          %442 = dma.done %s438, 128
        $region52: #{tpu_custom_call.1} parent=47 // pred_fallthru
          _
      $region48: #{tpu_custom_call.1} parent=5 // pred_fallthru
        _
    $region6: #{tpu_custom_call.1} parent=1 // loop_footer
      %s18 = sadd.s32 1, %s14
    $region7: #{tpu_custom_call.1} parent=1 // loop_footer_branch
      %13 = sbr.rel target = $region3
    $region8: #{tpu_custom_call.1} parent=1 // loop_exit
      _
    %443 = vsyncpa [#allocation3], 1
    %s444 = scalar_lea.sflag [#allocation3], 1
    %445 = vsyncpa %s444, 1

</llo_original>
